<compile_context>
chip_gen: v6e
topology: v6e:2x2x1
jax: 0.10.0
libtpu: 0.0.40
codegen_flags: <defaults>
</compile_context>

<pallas_src>
import math

import jax
import jax.numpy as jnp
from jax.experimental import pallas as pl
from jax.experimental.pallas import tpu as pltpu


def _round_up(n, m):
    return ((n + m - 1) // m) * m


def qnet_kernel(x_ref, w1_ref, b1_ref, w2_ref, b2_ref, q_ref):
    # fc1: (tb, in) @ (in, hid_p) on the MXU with f32 accumulation; bias + ReLU on the VPU.
    h = jnp.dot(x_ref[...], w1_ref[...], preferred_element_type=jnp.float32)
    h = jnp.maximum(h + b1_ref[...], 0.0)
    # fc2: (tb, hid_p) @ (hid_p, out_size); store at native out_size width (no padded lanes to HBM).
    q = jnp.dot(h, w2_ref[...], preferred_element_type=jnp.float32)
    q_ref[...] = (q + b2_ref[...]).astype(q_ref.dtype)


def pad_qnet_params(w1, b1, w2, b2):
    """Zero-pad ONLY the hidden dim to a 128-lane tile (done once at init).

    Exact: padded hidden units have zero weights and zero bias, so relu(0)=0
    and they contribute nothing through the (zero) padded rows of w2.
    Input and output feature dims keep their native sizes, so no padded x copy
    and no inflated q writeback are ever materialized in HBM.
    """
    in_size, hidden = w1.shape
    out_size = w2.shape[1]
    hid_p = max(_round_up(hidden, 128), 128)
    f32 = jnp.float32
    w1_p = jnp.zeros((in_size, hid_p), f32).at[:, :hidden].set(w1.astype(f32))
    b1_p = jnp.zeros((1, hid_p), f32).at[:, :hidden].set(b1.reshape(1, -1).astype(f32))
    w2_p = jnp.zeros((hid_p, out_size), f32).at[:hidden, :].set(w2.astype(f32))
    b2_p = b2.reshape(1, -1).astype(f32)
    return w1_p, b1_p, w2_p, b2_p


def _pick_batch_tile(batch):
    # DMA/overhead-bound kernel: one grid step for small batches (no per-step
    # overhead or pipeline fill/drain on single-TC v5e/v6e); 512-row tiles for
    # large replay-buffer batches (>=2 tiles also feeds both v7x TensorCores).
    if batch <= 512:
        return _round_up(batch, 8)
    return 512


def qnet_forward(x, w1_p, b1_p, w2_p, b2_p, *, batch_tile=None):
    """q = relu(x @ w1 + b1) @ w2 + b2 using params from pad_qnet_params.

    x: (batch, in_size) float32. Returns (batch, out_size) float32.
    """
    batch, in_size = x.shape
    hid_p = w1_p.shape[1]
    out_size = w2_p.shape[1]

    tb = batch_tile if batch_tile is not None else _pick_batch_tile(batch)
    batch_p = _round_up(batch, tb)
    if batch_p != batch:
        # Only the batch axis is ever padded (cheap; rows sliced off below).
        x = jnp.pad(x, ((0, batch_p - batch), (0, 0)))

    flops = 2 * batch_p * (in_size * hid_p + hid_p * out_size)
    bytes_accessed = 4 * (
        batch_p * in_size                                   # x read
        + w1_p.size + b1_p.size + w2_p.size + b2_p.size     # VMEM-resident params
        + batch_p * out_size                                # q write
    )

    q = pl.pallas_call(
        qnet_kernel,
        out_shape=jax.ShapeDtypeStruct((batch_p, out_size), jnp.float32),
        grid_spec=pl.GridSpec(
            grid=(batch_p // tb,),
            in_specs=[
                pl.BlockSpec((tb, in_size), lambda i: (i, 0)),      # x: streams along batch, native width
                pl.BlockSpec((in_size, hid_p), lambda i: (0, 0)),   # w1: VMEM-resident (constant index_map)
                pl.BlockSpec((1, hid_p), lambda i: (0, 0)),         # b1: VMEM-resident
                pl.BlockSpec((hid_p, out_size), lambda i: (0, 0)),  # w2: VMEM-resident
                pl.BlockSpec((1, out_size), lambda i: (0, 0)),      # b2: VMEM-resident
            ],
            out_specs=pl.BlockSpec((tb, out_size), lambda i: (i, 0)),  # native-width writeback
        ),
        compiler_params=pltpu.CompilerParams(
            dimension_semantics=("parallel",),  # shard batch tiles across v7x TCs
        ),
        cost_estimate=pl.CostEstimate(
            flops=flops, transcendentals=0, bytes_accessed=bytes_accessed),
    )(x, w1_p, b1_p, w2_p, b2_p)

    return q if batch_p == batch else q[:batch]


def init_qnet_params(key, input_size, hidden_size, output_size):
    """PyTorch nn.Linear default init: U(-1/sqrt(fan_in), 1/sqrt(fan_in)).

    Weights stored pre-transposed as (in_features, out_features); biases 1-D.
    """
    k1, k2, k3, k4 = jax.random.split(key, 4)
    bound1 = 1.0 / math.sqrt(input_size)
    bound2 = 1.0 / math.sqrt(hidden_size)
    w1 = jax.random.uniform(k1, (input_size, hidden_size), jnp.float32, -bound1, bound1)
    b1 = jax.random.uniform(k2, (hidden_size,), jnp.float32, -bound1, bound1)
    w2 = jax.random.uniform(k3, (hidden_size, output_size), jnp.float32, -bound2, bound2)
    b2 = jax.random.uniform(k4, (output_size,), jnp.float32, -bound2, bound2)
    return w1, b1, w2, b2


if __name__ == "__main__":
    input_size, hidden_size, output_size = 16, 32, 4
    batch = 256  # replay-buffer-style batched evaluation

    key = jax.random.PRNGKey(0)
    kx, kp = jax.random.split(key)
    x = jax.random.normal(kx, (batch, input_size), jnp.float32)
    w1, b1, w2, b2 = init_qnet_params(kp, input_size, hidden_size, output_size)

    # Pad hidden dim once at init, then run the fused f32 kernel.
    w1_p, b1_p, w2_p, b2_p = pad_qnet_params(w1, b1, w2, b2)
    q = qnet_forward(x, w1_p, b1_p, w2_p, b2_p)
    jax.block_until_ready(q)
    assert q.shape == (batch, output_size)

    # Full-precision f32 reference (PyTorch-equivalent math).
    hi = jax.lax.Precision.HIGHEST
    h_ref = jnp.maximum(jnp.dot(x, w1, precision=hi) + b1[None, :], 0.0)
    q_ref = jnp.dot(h_ref, w2, precision=hi) + b2[None, :]
    assert jnp.allclose(q, q_ref, atol=2e-3, rtol=2e-3), float(jnp.max(jnp.abs(q - q_ref)))

    print("KERNEL_OK")
</pallas_src>

<mosaic_0001>
module attributes {stable_mosaic.version = 11 : i64} {
  func.func @qnet_kernel(%arg0: i32, %arg1: memref<256x16xf32, #tpu.memory_space<vmem>>, %arg2: memref<16x128xf32, #tpu.memory_space<vmem>>, %arg3: memref<1x128xf32, #tpu.memory_space<vmem>>, %arg4: memref<128x4xf32, #tpu.memory_space<vmem>>, %arg5: memref<1x4xf32, #tpu.memory_space<vmem>>, %arg6: memref<256x4xf32, #tpu.memory_space<vmem>>) attributes {dimension_semantics = [#tpu.dimension_semantics<parallel>], iteration_bounds = array<i64: 1>, scalar_prefetch = 0 : i64, scratch_operands = 0 : i64, tpu.core_type = #tpu.core_type<tc>, window_params = [{transform_indices = @transform_0, window_bounds = array<i64: 256, 16>}, {pipeline_mode = #tpu.pipeline_mode<synchronous>, transform_indices = @transform_1, window_bounds = array<i64: 16, 128>}, {pipeline_mode = #tpu.pipeline_mode<synchronous>, transform_indices = @transform_2, window_bounds = array<i64: 1, 128>}, {pipeline_mode = #tpu.pipeline_mode<synchronous>, transform_indices = @transform_3, window_bounds = array<i64: 128, 4>}, {pipeline_mode = #tpu.pipeline_mode<synchronous>, transform_indices = @transform_4, window_bounds = array<i64: 1, 4>}, {transform_indices = @transform_5, window_bounds = array<i64: 256, 4>}]} {
    %c0 = arith.constant 0 : index
    %c0_0 = arith.constant 0 : index
    %0 = vector.load %arg1[%c0, %c0_0] : memref<256x16xf32, #tpu.memory_space<vmem>>, vector<256x16xf32>
    %c0_1 = arith.constant 0 : index
    %c0_2 = arith.constant 0 : index
    %1 = vector.load %arg2[%c0_1, %c0_2] : memref<16x128xf32, #tpu.memory_space<vmem>>, vector<16x128xf32>
    %cst = arith.constant dense<0.000000e+00> : vector<256x128xf32>
    %2 = tpu.matmul %0, %1, %cst {dimension_numbers = #tpu.dot_dimension_numbers<[1], [0], [0], [1], [0, 0, 1, 1], [], []>} : vector<256x16xf32>, vector<16x128xf32>, vector<256x128xf32> -> vector<256x128xf32>
    %c0_3 = arith.constant 0 : index
    %c0_4 = arith.constant 0 : index
    %3 = vector.load %arg3[%c0_3, %c0_4] : memref<1x128xf32, #tpu.memory_space<vmem>>, vector<1x128xf32>
    %4 = vector.broadcast %3 : vector<1x128xf32> to vector<256x128xf32>
    %5 = arith.addf %2, %4 : vector<256x128xf32>
    %cst_5 = arith.constant 0.000000e+00 : f32
    %6 = vector.broadcast %cst_5 : f32 to vector<256x128xf32>
    %7 = arith.maximumf %5, %6 : vector<256x128xf32>
    %c0_6 = arith.constant 0 : index
    %c0_7 = arith.constant 0 : index
    %8 = vector.load %arg4[%c0_6, %c0_7] : memref<128x4xf32, #tpu.memory_space<vmem>>, vector<128x4xf32>
    %cst_8 = arith.constant dense<0.000000e+00> : vector<256x4xf32>
    %9 = tpu.matmul %7, %8, %cst_8 {dimension_numbers = #tpu.dot_dimension_numbers<[1], [0], [0], [1], [0, 0, 1, 1], [], []>} : vector<256x128xf32>, vector<128x4xf32>, vector<256x4xf32> -> vector<256x4xf32>
    %c0_9 = arith.constant 0 : index
    %c0_10 = arith.constant 0 : index
    %10 = vector.load %arg5[%c0_9, %c0_10] : memref<1x4xf32, #tpu.memory_space<vmem>>, vector<1x4xf32>
    %11 = vector.broadcast %10 : vector<1x4xf32> to vector<256x4xf32>
    %12 = arith.addf %9, %11 : vector<256x4xf32>
    %c0_11 = arith.constant 0 : index
    %c0_12 = arith.constant 0 : index
    %13 = vector.load %arg6[%c0_11, %c0_12] : memref<256x4xf32, #tpu.memory_space<vmem>>, vector<256x4xf32>
    tpu.vector_store %arg6[%c0_11, %c0_12], %12 {strides = array<i32>} : memref<256x4xf32, #tpu.memory_space<vmem>>, vector<256x4xf32>,
    return
  }
  func.func @transform_0(%arg0: i32) -> (i32, i32) {
    %c0_i32 = arith.constant 0 : i32
    %c0_i32_0 = arith.constant 0 : i32
    return %arg0, %c0_i32 : i32, i32
  }
  func.func @transform_1(%arg0: i32) -> (i32, i32) {
    %c0_i32 = arith.constant 0 : i32
    %c0_i32_0 = arith.constant 0 : i32
    %c0_i32_1 = arith.constant 0 : i32
    return %c0_i32, %c0_i32_0 : i32, i32
  }
  func.func @transform_2(%arg0: i32) -> (i32, i32) {
    %c0_i32 = arith.constant 0 : i32
    %c0_i32_0 = arith.constant 0 : i32
    %c0_i32_1 = arith.constant 0 : i32
    return %c0_i32, %c0_i32_0 : i32, i32
  }
  func.func @transform_3(%arg0: i32) -> (i32, i32) {
    %c0_i32 = arith.constant 0 : i32
    %c0_i32_0 = arith.constant 0 : i32
    %c0_i32_1 = arith.constant 0 : i32
    return %c0_i32, %c0_i32_0 : i32, i32
  }
  func.func @transform_4(%arg0: i32) -> (i32, i32) {
    %c0_i32 = arith.constant 0 : i32
    %c0_i32_0 = arith.constant 0 : i32
    %c0_i32_1 = arith.constant 0 : i32
    return %c0_i32, %c0_i32_0 : i32, i32
  }
  func.func @transform_5(%arg0: i32) -> (i32, i32) {
    %c0_i32 = arith.constant 0 : i32
    %c0_i32_0 = arith.constant 0 : i32
    return %arg0, %c0_i32 : i32, i32
  }
}

</mosaic_0001>

<llo_original>
// kernel: tpu_custom_call.1
$region0: #{tpu_custom_call.1}
  #allocation0 [shape = 'u32[]', space=smem, size = 0x4, offset = 0x4, fixed_abs, tag = 'smem constant byte address 0x4 - core index']
  #allocation1 [shape = 'u32[144,128]{1,0:T(1,128)}', space=vmem, size = 0x12000, scoped, tag = 'internal scratch']
  %s0 = inlined_call_operand.vmem [shape: f32[256,16], index: 0, kind: input, shape index: {}]
  %s1 = inlined_call_operand.vmem [shape: f32[16,128], index: 1, kind: input, shape index: {}]
  %s2 = inlined_call_operand.vmem [shape: f32[1,128], index: 2, kind: input, shape index: {}]
  %s3 = inlined_call_operand.vmem [shape: f32[128,4], index: 3, kind: input, shape index: {}]
  %s4 = inlined_call_operand.vmem [shape: f32[1,4], index: 4, kind: input, shape index: {}]
  %s5 = inlined_call_operand.vmem [shape: f32[256,4], index: 5, kind: output, shape index: {}]
  %s6 = sld [smem:[#allocation0]]
  $region30: #{tpu_custom_call.1} parent=0
    _
  %s8 = ssub.s32 1, %s6
  %s9 = scalar_select 0, %s8, %s6
  // Predicated region
  $region2: #{tpu_custom_call.1} parent=0 // pred_check
    _
  $region3: #{tpu_custom_call.1} parent=0 // pred_check_branch
    %11 = sbr.rel (0) target = $region5
  $region4: #{tpu_custom_call.1} parent=0 // pred_region
    _
  $region5: #{tpu_custom_call.1} parent=0 // pred_fallthru
    _
  // Predicated region
  $region6: #{tpu_custom_call.1} parent=0 // pred_check
    _
  $region7: #{tpu_custom_call.1} parent=0 // pred_check_branch
    %13 = sbr.rel (0) target = $region9
  $region8: #{tpu_custom_call.1} parent=0 // pred_region
    _
  $region9: #{tpu_custom_call.1} parent=0 // pred_fallthru
    _
  // Predicated region
  $region10: #{tpu_custom_call.1} parent=0 // pred_check
    _
  $region11: #{tpu_custom_call.1} parent=0 // pred_check_branch
    %15 = sbr.rel (0) target = $region13
  $region12: #{tpu_custom_call.1} parent=0 // pred_region
    _
  $region13: #{tpu_custom_call.1} parent=0 // pred_fallthru
    _
  // Predicated region
  $region14: #{tpu_custom_call.1} parent=0 // pred_check
    _
  $region15: #{tpu_custom_call.1} parent=0 // pred_check_branch
    %17 = sbr.rel (0) target = $region17
  $region16: #{tpu_custom_call.1} parent=0 // pred_region
    _
  $region17: #{tpu_custom_call.1} parent=0 // pred_fallthru
    _
  // Predicated region
  $region18: #{tpu_custom_call.1} parent=0 // pred_check
    _
  $region19: #{tpu_custom_call.1} parent=0 // pred_check_branch
    %19 = sbr.rel (0) target = $region21
  $region20: #{tpu_custom_call.1} parent=0 // pred_region
    _
  $region21: #{tpu_custom_call.1} parent=0 // pred_fallthru
    _
  %v20 = vld [vmem:[%s0] sm:$0xff]
  %v21 = vld [vmem:[%s0 + $0x8] sm:$0xff]
  %v22 = vld [vmem:[%s0 + $0x10] sm:$0xff]
  %v23 = vld [vmem:[%s0 + $0x18] sm:$0xff]
  %v24 = vld [vmem:[%s0 + $0x20] sm:$0xff]
  %v25 = vld [vmem:[%s0 + $0x28] sm:$0xff]
  %v26 = vld [vmem:[%s0 + $0x30] sm:$0xff]
  %v27 = vld [vmem:[%s0 + $0x38] sm:$0xff]
  %v28 = vld [vmem:[%s0 + $0x40] sm:$0xff]
  %v29 = vld [vmem:[%s0 + $0x48] sm:$0xff]
  %v30 = vld [vmem:[%s0 + $0x50] sm:$0xff]
  %v31 = vld [vmem:[%s0 + $0x58] sm:$0xff]
  %v32 = vld [vmem:[%s0 + $0x60] sm:$0xff]
  %v33 = vld [vmem:[%s0 + $0x68] sm:$0xff]
  %v34 = vld [vmem:[%s0 + $0x70] sm:$0xff]
  %v35 = vld [vmem:[%s0 + $0x78] sm:$0xff]
  %v36 = vld [vmem:[%s0 + $0x80] sm:$0xff]
  %v37 = vld [vmem:[%s0 + $0x88] sm:$0xff]
  %v38 = vld [vmem:[%s0 + $0x90] sm:$0xff]
  %v39 = vld [vmem:[%s0 + $0x98] sm:$0xff]
  %v40 = vld [vmem:[%s0 + $0xa0] sm:$0xff]
  %v41 = vld [vmem:[%s0 + $0xa8] sm:$0xff]
  %v42 = vld [vmem:[%s0 + $0xb0] sm:$0xff]
  %v43 = vld [vmem:[%s0 + $0xb8] sm:$0xff]
  %v44 = vld [vmem:[%s0 + $0xc0] sm:$0xff]
  %v45 = vld [vmem:[%s0 + $0xc8] sm:$0xff]
  %v46 = vld [vmem:[%s0 + $0xd0] sm:$0xff]
  %v47 = vld [vmem:[%s0 + $0xd8] sm:$0xff]
  %v48 = vld [vmem:[%s0 + $0xe0] sm:$0xff]
  %v49 = vld [vmem:[%s0 + $0xe8] sm:$0xff]
  %v50 = vld [vmem:[%s0 + $0xf0] sm:$0xff]
  %v51 = vld [vmem:[%s0 + $0xf8] sm:$0xff]
  %v52 = vld [vmem:[%s1] sm:$0xff]
  %v53 = vld [vmem:[%s1 + $0x8] sm:$0xff]
  %v54 = vld [vmem:[%s2] sm:$0x1]
  %v56 = vlaneseq
  %v57 = vshrl.u32 %v56, 7
  %v58 = vsub.s32 0, %v57
  %v59 = vrot.slane %v54, %v58
  %vm61 = vcmask 130048
  %v63 = vsel %vm61, %v20, 0
  %v66 = vsel %vm61, %v21, 0
  %v69 = vsel %vm61, %v22, 0
  %v72 = vsel %vm61, %v23, 0
  %v75 = vsel %vm61, %v24, 0
  %v78 = vsel %vm61, %v25, 0
  %v81 = vsel %vm61, %v26, 0
  %v84 = vsel %vm61, %v27, 0
  %v87 = vsel %vm61, %v28, 0
  %v90 = vsel %vm61, %v29, 0
  %v93 = vsel %vm61, %v30, 0
  %v96 = vsel %vm61, %v31, 0
  %v99 = vsel %vm61, %v32, 0
  %v102 = vsel %vm61, %v33, 0
  %v105 = vsel %vm61, %v34, 0
  %v108 = vsel %vm61, %v35, 0
  %v111 = vsel %vm61, %v36, 0
  %v114 = vsel %vm61, %v37, 0
  %v117 = vsel %vm61, %v38, 0
  %v120 = vsel %vm61, %v39, 0
  %v123 = vsel %vm61, %v40, 0
  %v126 = vsel %vm61, %v41, 0
  %v129 = vsel %vm61, %v42, 0
  %v132 = vsel %vm61, %v43, 0
  %v135 = vsel %vm61, %v44, 0
  %v138 = vsel %vm61, %v45, 0
  %v141 = vsel %vm61, %v46, 0
  %v144 = vsel %vm61, %v47, 0
  %v147 = vsel %vm61, %v48, 0
  %v150 = vsel %vm61, %v49, 0
  %v153 = vsel %vm61, %v50, 0
  %v156 = vsel %vm61, %v51, 0
  %158 = vmatprep.subr.mxu0 0.0
  %159 = vmatpush1.msra.mxu0 0.0
  %160 = vmatprep.subr.mxu0 0.0
  %161 = vmatpush1.msra.mxu0 0.0
  %162 = vmatprep.subr.mxu0 0.0
  %163 = vmatpush1.msra.mxu0 0.0
  %164 = vmatprep.subr.mxu0 0.0
  %165 = vmatpush1.msra.mxu0 0.0
  %166 = vmatprep.subr.mxu0 0.0
  %167 = vmatpush1.msra.mxu0 0.0
  %168 = vmatprep.subr.mxu0 0.0
  %169 = vmatpush1.msra.mxu0 0.0
  %170 = vmatprep.subr.mxu0 0.0
  %171 = vmatpush1.msra.mxu0 0.0
  %172 = vmatprep.subr.mxu0 0.0
  %173 = vmatpush1.msra.mxu0 0.0
  %174 = vmatprep.subr.mxu0 0.0
  %175 = vmatpush1.msra.mxu0 0.0
  %176 = vmatprep.subr.mxu0 0.0
  %177 = vmatpush1.msra.mxu0 0.0
  %178 = vmatprep.subr.mxu0 0.0
  %179 = vmatpush1.msra.mxu0 0.0
  %180 = vmatprep.subr.mxu0 0.0
  %181 = vmatpush1.msra.mxu0 0.0
  %182 = vmatprep.subr.mxu0 0.0
  %183 = vmatpush1.msra.mxu0 0.0
  %184 = vmatprep.subr.mxu0 0.0
  %185 = vmatpush1.msra.mxu0 0.0
  %186 = vmatprep.subr.mxu0 0.0
  %187 = vmatpush1.msra.mxu0 %v53
  %188 = vmatprep.subr.mxu0 0.0
  %189 = vmatpush1.msra.mxu0 %v52
  %190 = vmatprep.subr.mxu0 0.0
  %191 = vmatpush2.msra.mxu0 0.0
  %192 = vmatprep.subr.mxu0 0.0
  %193 = vmatpush2.msra.mxu0 0.0
  %194 = vmatprep.subr.mxu0 0.0
  %195 = vmatpush2.msra.mxu0 0.0
  %196 = vmatprep.subr.mxu0 0.0
  %197 = vmatpush2.msra.mxu0 0.0
  %198 = vmatprep.subr.mxu0 0.0
  %199 = vmatpush2.msra.mxu0 0.0
  %200 = vmatprep.subr.mxu0 0.0
  %201 = vmatpush2.msra.mxu0 0.0
  %202 = vmatprep.subr.mxu0 0.0
  %203 = vmatpush2.msra.mxu0 0.0
  %204 = vmatprep.subr.mxu0 0.0
  %205 = vmatpush2.msra.mxu0 0.0
  %206 = vmatprep.subr.mxu0 0.0
  %207 = vmatpush2.msra.mxu0 0.0
  %208 = vmatprep.subr.mxu0 0.0
  %209 = vmatpush2.msra.mxu0 0.0
  %210 = vmatprep.subr.mxu0 0.0
  %211 = vmatpush2.msra.mxu0 0.0
  %212 = vmatprep.subr.mxu0 0.0
  %213 = vmatpush2.msra.mxu0 0.0
  %214 = vmatprep.subr.mxu0 0.0
  %215 = vmatpush2.msra.mxu0 0.0
  %216 = vmatprep.subr.mxu0 0.0
  %217 = vmatpush2.msra.mxu0 0.0
  %218 = vmatprep.subr.mxu0 0.0
  %219 = vmatpush2.msra.mxu0 0.0
  %220 = vmatprep.subr.mxu0 0.0
  %221 = vmatpush2.msra.mxu0 0.0
  %222 = vmatprep.mubr.f32.mxu0 0.0
  %223 = vmatmul.mubr.f32.gmra.mxu0 %v63
  %v224 = vpop.f32.mrf.mxu0
  %v225 = vadd.f32 %v59, %v224
  %v226 = vpop.f32.mrf.mxu0
  %227 = vmatprep.mubr.f32.mxu0 0.0
  %228 = vmatmul.mubr.f32.gmra.mxu0 %v66
  %v229 = vpop.f32.mrf.mxu0
  %v230 = vadd.f32 %v59, %v229
  %v231 = vpop.f32.mrf.mxu0
  %232 = vmatprep.mubr.f32.mxu0 0.0
  %233 = vmatmul.mubr.f32.gmra.mxu0 %v69
  %v234 = vpop.f32.mrf.mxu0
  %v235 = vadd.f32 %v59, %v234
  %v236 = vpop.f32.mrf.mxu0
  %237 = vmatprep.mubr.f32.mxu0 0.0
  %238 = vmatmul.mubr.f32.gmra.mxu0 %v72
  %v239 = vpop.f32.mrf.mxu0
  %v240 = vadd.f32 %v59, %v239
  %v241 = vpop.f32.mrf.mxu0
  %242 = vmatprep.mubr.f32.mxu0 0.0
  %243 = vmatmul.mubr.f32.gmra.mxu0 %v75
  %v244 = vpop.f32.mrf.mxu0
  %v245 = vadd.f32 %v59, %v244
  %v246 = vpop.f32.mrf.mxu0
  %247 = vmatprep.mubr.f32.mxu0 0.0
  %248 = vmatmul.mubr.f32.gmra.mxu0 %v78
  %v249 = vpop.f32.mrf.mxu0
  %v250 = vadd.f32 %v59, %v249
  %v251 = vpop.f32.mrf.mxu0
  %252 = vmatprep.mubr.f32.mxu0 0.0
  %253 = vmatmul.mubr.f32.gmra.mxu0 %v81
  %v254 = vpop.f32.mrf.mxu0
  %v255 = vadd.f32 %v59, %v254
  %v256 = vpop.f32.mrf.mxu0
  %257 = vmatprep.mubr.f32.mxu0 0.0
  %258 = vmatmul.mubr.f32.gmra.mxu0 %v84
  %v259 = vpop.f32.mrf.mxu0
  %v260 = vadd.f32 %v59, %v259
  %v261 = vpop.f32.mrf.mxu0
  %262 = vmatprep.mubr.f32.mxu0 0.0
  %263 = vmatmul.mubr.f32.gmra.mxu0 %v87
  %v264 = vpop.f32.mrf.mxu0
  %v265 = vadd.f32 %v59, %v264
  %v266 = vpop.f32.mrf.mxu0
  %267 = vmatprep.mubr.f32.mxu0 0.0
  %268 = vmatmul.mubr.f32.gmra.mxu0 %v90
  %v269 = vpop.f32.mrf.mxu0
  %v270 = vadd.f32 %v59, %v269
  %v271 = vpop.f32.mrf.mxu0
  %272 = vmatprep.mubr.f32.mxu0 0.0
  %273 = vmatmul.mubr.f32.gmra.mxu0 %v93
  %v274 = vpop.f32.mrf.mxu0
  %v275 = vadd.f32 %v59, %v274
  %v276 = vpop.f32.mrf.mxu0
  %277 = vmatprep.mubr.f32.mxu0 0.0
  %278 = vmatmul.mubr.f32.gmra.mxu0 %v96
  %v279 = vpop.f32.mrf.mxu0
  %v280 = vadd.f32 %v59, %v279
  %v281 = vpop.f32.mrf.mxu0
  %282 = vmatprep.mubr.f32.mxu0 0.0
  %283 = vmatmul.mubr.f32.gmra.mxu0 %v99
  %v284 = vpop.f32.mrf.mxu0
  %v285 = vadd.f32 %v59, %v284
  %v286 = vpop.f32.mrf.mxu0
  %287 = vmatprep.mubr.f32.mxu0 0.0
  %288 = vmatmul.mubr.f32.gmra.mxu0 %v102
  %v289 = vpop.f32.mrf.mxu0
  %v290 = vadd.f32 %v59, %v289
  %v291 = vpop.f32.mrf.mxu0
  %292 = vmatprep.mubr.f32.mxu0 0.0
  %293 = vmatmul.mubr.f32.gmra.mxu0 %v105
  %v294 = vpop.f32.mrf.mxu0
  %v295 = vadd.f32 %v59, %v294
  %v296 = vpop.f32.mrf.mxu0
  %297 = vmatprep.mubr.f32.mxu0 0.0
  %298 = vmatmul.mubr.f32.gmra.mxu0 %v108
  %v299 = vpop.f32.mrf.mxu0
  %v300 = vadd.f32 %v59, %v299
  %v301 = vpop.f32.mrf.mxu0
  %302 = vmatprep.mubr.f32.mxu0 0.0
  %303 = vmatmul.mubr.f32.gmra.mxu0 %v111
  %v304 = vpop.f32.mrf.mxu0
  %v305 = vadd.f32 %v59, %v304
  %v306 = vpop.f32.mrf.mxu0
  %307 = vmatprep.mubr.f32.mxu0 0.0
  %308 = vmatmul.mubr.f32.gmra.mxu0 %v114
  %v309 = vpop.f32.mrf.mxu0
  %v310 = vadd.f32 %v59, %v309
  %v311 = vpop.f32.mrf.mxu0
  %312 = vmatprep.mubr.f32.mxu0 0.0
  %313 = vmatmul.mubr.f32.gmra.mxu0 %v117
  %v314 = vpop.f32.mrf.mxu0
  %v315 = vadd.f32 %v59, %v314
  %v316 = vpop.f32.mrf.mxu0
  %317 = vmatprep.mubr.f32.mxu0 0.0
  %318 = vmatmul.mubr.f32.gmra.mxu0 %v120
  %v319 = vpop.f32.mrf.mxu0
  %v320 = vadd.f32 %v59, %v319
  %v321 = vpop.f32.mrf.mxu0
  %322 = vmatprep.mubr.f32.mxu0 0.0
  %323 = vmatmul.mubr.f32.gmra.mxu0 %v123
  %v324 = vpop.f32.mrf.mxu0
  %v325 = vadd.f32 %v59, %v324
  %v326 = vpop.f32.mrf.mxu0
  %327 = vmatprep.mubr.f32.mxu0 0.0
  %328 = vmatmul.mubr.f32.gmra.mxu0 %v126
  %v329 = vpop.f32.mrf.mxu0
  %v330 = vadd.f32 %v59, %v329
  %v331 = vpop.f32.mrf.mxu0
  %332 = vmatprep.mubr.f32.mxu0 0.0
  %333 = vmatmul.mubr.f32.gmra.mxu0 %v129
  %v334 = vpop.f32.mrf.mxu0
  %v335 = vadd.f32 %v59, %v334
  %v336 = vpop.f32.mrf.mxu0
  %337 = vmatprep.mubr.f32.mxu0 0.0
  %338 = vmatmul.mubr.f32.gmra.mxu0 %v132
  %v339 = vpop.f32.mrf.mxu0
  %v340 = vadd.f32 %v59, %v339
  %v341 = vpop.f32.mrf.mxu0
  %342 = vmatprep.mubr.f32.mxu0 0.0
  %343 = vmatmul.mubr.f32.gmra.mxu0 %v135
  %v344 = vpop.f32.mrf.mxu0
  %v345 = vadd.f32 %v59, %v344
  %v346 = vpop.f32.mrf.mxu0
  %347 = vmatprep.mubr.f32.mxu0 0.0
  %348 = vmatmul.mubr.f32.gmra.mxu0 %v138
  %v349 = vpop.f32.mrf.mxu0
  %v350 = vadd.f32 %v59, %v349
  %v351 = vpop.f32.mrf.mxu0
  %352 = vmatprep.mubr.f32.mxu0 0.0
  %353 = vmatmul.mubr.f32.gmra.mxu0 %v141
  %v354 = vpop.f32.mrf.mxu0
  %v355 = vadd.f32 %v59, %v354
  %v356 = vpop.f32.mrf.mxu0
  %357 = vmatprep.mubr.f32.mxu0 0.0
  %358 = vmatmul.mubr.f32.gmra.mxu0 %v144
  %v359 = vpop.f32.mrf.mxu0
  %v360 = vadd.f32 %v59, %v359
  %v361 = vpop.f32.mrf.mxu0
  %362 = vmatprep.mubr.f32.mxu0 0.0
  %363 = vmatmul.mubr.f32.gmra.mxu0 %v147
  %v364 = vpop.f32.mrf.mxu0
  %v365 = vadd.f32 %v59, %v364
  %v366 = vpop.f32.mrf.mxu0
  %367 = vmatprep.mubr.f32.mxu0 0.0
  %368 = vmatmul.mubr.f32.gmra.mxu0 %v150
  %v369 = vpop.f32.mrf.mxu0
  %v370 = vadd.f32 %v59, %v369
  %v371 = vpop.f32.mrf.mxu0
  %372 = vmatprep.mubr.f32.mxu0 0.0
  %373 = vmatmul.mubr.f32.gmra.mxu0 %v153
  %v374 = vpop.f32.mrf.mxu0
  %v375 = vadd.f32 %v59, %v374
  %v376 = vpop.f32.mrf.mxu0
  %377 = vmatprep.mubr.f32.mxu0 0.0
  %378 = vmatmul.mubr.f32.gmra.mxu0 %v156
  %v379 = vpop.f32.mrf.mxu0
  %v380 = vadd.f32 %v59, %v379
  %v381 = vpop.f32.mrf.mxu0
  %382 = vdwg.mxu0
  %v383 = vmax.f32 %v225, 0.0
  %v384 = vmax.f32 %v230, 0.0
  %v385 = vmax.f32 %v235, 0.0
  %v386 = vmax.f32 %v240, 0.0
  %v387 = vmax.f32 %v245, 0.0
  %v388 = vmax.f32 %v250, 0.0
  %v389 = vmax.f32 %v255, 0.0
  %v390 = vmax.f32 %v260, 0.0
  %v391 = vmax.f32 %v265, 0.0
  %v392 = vmax.f32 %v270, 0.0
  %v393 = vmax.f32 %v275, 0.0
  %v394 = vmax.f32 %v280, 0.0
  %v395 = vmax.f32 %v285, 0.0
  %v396 = vmax.f32 %v290, 0.0
  %v397 = vmax.f32 %v295, 0.0
  %v398 = vmax.f32 %v300, 0.0
  %v399 = vmax.f32 %v305, 0.0
  %v400 = vmax.f32 %v310, 0.0
  %v401 = vmax.f32 %v315, 0.0
  %v402 = vmax.f32 %v320, 0.0
  %v403 = vmax.f32 %v325, 0.0
  %v404 = vmax.f32 %v330, 0.0
  %v405 = vmax.f32 %v335, 0.0
  %v406 = vmax.f32 %v340, 0.0
  %v407 = vmax.f32 %v345, 0.0
  %v408 = vmax.f32 %v350, 0.0
  %v409 = vmax.f32 %v355, 0.0
  %v410 = vmax.f32 %v360, 0.0
  %v411 = vmax.f32 %v365, 0.0
  %v412 = vmax.f32 %v370, 0.0
  %v413 = vmax.f32 %v375, 0.0
  %v414 = vmax.f32 %v380, 0.0
  %v415 = vld [vmem:[%s3] sm:$0xff]
  %v416 = vld [vmem:[%s3 + $0x8] sm:$0xff]
  %v417 = vld [vmem:[%s3 + $0x10] sm:$0xff]
  %v418 = vld [vmem:[%s3 + $0x18] sm:$0xff]
  %v419 = vld [vmem:[%s3 + $0x20] sm:$0xff]
  %v420 = vld [vmem:[%s3 + $0x28] sm:$0xff]
  %v421 = vld [vmem:[%s3 + $0x30] sm:$0xff]
  %v422 = vld [vmem:[%s3 + $0x38] sm:$0xff]
  %v423 = vld [vmem:[%s3 + $0x40] sm:$0xff]
  %v424 = vld [vmem:[%s3 + $0x48] sm:$0xff]
  %v425 = vld [vmem:[%s3 + $0x50] sm:$0xff]
  %v426 = vld [vmem:[%s3 + $0x58] sm:$0xff]
  %v427 = vld [vmem:[%s3 + $0x60] sm:$0xff]
  %v428 = vld [vmem:[%s3 + $0x68] sm:$0xff]
  %v429 = vld [vmem:[%s3 + $0x70] sm:$0xff]
  %v430 = vld [vmem:[%s3 + $0x78] sm:$0xff]
  %v431 = vld [vmem:[%s4] sm:$0x1]
  %v433 = vlaneseq
  %v434 = vshrl.u32 %v433, 7
  %v435 = vsub.s32 0, %v434
  %v436 = vrot.slane %v431, %v435
  %438 = vmatprep.subr.mxu0 0.0
  %439 = vmatpush1.msra.mxu0 %v430
  %440 = vmatprep.subr.mxu0 0.0
  %441 = vmatpush1.msra.mxu0 %v429
  %442 = vmatprep.subr.mxu0 0.0
  %443 = vmatpush1.msra.mxu0 %v428
  %444 = vmatprep.subr.mxu0 0.0
  %445 = vmatpush1.msra.mxu0 %v427
  %446 = vmatprep.subr.mxu0 0.0
  %447 = vmatpush1.msra.mxu0 %v426
  %448 = vmatprep.subr.mxu0 0.0
  %449 = vmatpush1.msra.mxu0 %v425
  %450 = vmatprep.subr.mxu0 0.0
  %451 = vmatpush1.msra.mxu0 %v424
  %452 = vmatprep.subr.mxu0 0.0
  %453 = vmatpush1.msra.mxu0 %v423
  %454 = vmatprep.subr.mxu0 0.0
  %455 = vmatpush1.msra.mxu0 %v422
  %456 = vmatprep.subr.mxu0 0.0
  %457 = vmatpush1.msra.mxu0 %v421
  %458 = vmatprep.subr.mxu0 0.0
  %459 = vmatpush1.msra.mxu0 %v420
  %460 = vmatprep.subr.mxu0 0.0
  %461 = vmatpush1.msra.mxu0 %v419
  %462 = vmatprep.subr.mxu0 0.0
  %463 = vmatpush1.msra.mxu0 %v418
  %464 = vmatprep.subr.mxu0 0.0
  %465 = vmatpush1.msra.mxu0 %v417
  %466 = vmatprep.subr.mxu0 0.0
  %467 = vmatpush1.msra.mxu0 %v416
  %468 = vmatprep.subr.mxu0 0.0
  %469 = vmatpush1.msra.mxu0 %v415
  %470 = vmatprep.subr.mxu0 0.0
  %471 = vmatpush2.msra.mxu0 0.0
  %472 = vmatprep.subr.mxu0 0.0
  %473 = vmatpush2.msra.mxu0 0.0
  %474 = vmatprep.subr.mxu0 0.0
  %475 = vmatpush2.msra.mxu0 0.0
  %476 = vmatprep.subr.mxu0 0.0
  %477 = vmatpush2.msra.mxu0 0.0
  %478 = vmatprep.subr.mxu0 0.0
  %479 = vmatpush2.msra.mxu0 0.0
  %480 = vmatprep.subr.mxu0 0.0
  %481 = vmatpush2.msra.mxu0 0.0
  %482 = vmatprep.subr.mxu0 0.0
  %483 = vmatpush2.msra.mxu0 0.0
  %484 = vmatprep.subr.mxu0 0.0
  %485 = vmatpush2.msra.mxu0 0.0
  %486 = vmatprep.subr.mxu0 0.0
  %487 = vmatpush2.msra.mxu0 0.0
  %488 = vmatprep.subr.mxu0 0.0
  %489 = vmatpush2.msra.mxu0 0.0
  %490 = vmatprep.subr.mxu0 0.0
  %491 = vmatpush2.msra.mxu0 0.0
  %492 = vmatprep.subr.mxu0 0.0
  %493 = vmatpush2.msra.mxu0 0.0
  %494 = vmatprep.subr.mxu0 0.0
  %495 = vmatpush2.msra.mxu0 0.0
  %496 = vmatprep.subr.mxu0 0.0
  %497 = vmatpush2.msra.mxu0 0.0
  %498 = vmatprep.subr.mxu0 0.0
  %499 = vmatpush2.msra.mxu0 0.0
  %500 = vmatprep.subr.mxu0 0.0
  %501 = vmatpush2.msra.mxu0 0.0
  %502 = vmatprep.mubr.f32.mxu0 0.0
  %503 = vmatmul.mubr.f32.gmra.mxu0 %v383
  %v504 = vpop.f32.mrf.mxu0
  %v505 = vadd.f32 %v436, %v504
  %v506 = vpop.f32.mrf.mxu0
  %507 = vmatprep.mubr.f32.mxu0 0.0
  %508 = vmatmul.mubr.f32.gmra.mxu0 %v384
  %v509 = vpop.f32.mrf.mxu0
  %v510 = vadd.f32 %v436, %v509
  %v511 = vpop.f32.mrf.mxu0
  %512 = vmatprep.mubr.f32.mxu0 0.0
  %513 = vmatmul.mubr.f32.gmra.mxu0 %v385
  %v514 = vpop.f32.mrf.mxu0
  %v515 = vadd.f32 %v436, %v514
  %v516 = vpop.f32.mrf.mxu0
  %517 = vmatprep.mubr.f32.mxu0 0.0
  %518 = vmatmul.mubr.f32.gmra.mxu0 %v386
  %v519 = vpop.f32.mrf.mxu0
  %v520 = vadd.f32 %v436, %v519
  %v521 = vpop.f32.mrf.mxu0
  %522 = vmatprep.mubr.f32.mxu0 0.0
  %523 = vmatmul.mubr.f32.gmra.mxu0 %v387
  %v524 = vpop.f32.mrf.mxu0
  %v525 = vadd.f32 %v436, %v524
  %v526 = vpop.f32.mrf.mxu0
  %527 = vmatprep.mubr.f32.mxu0 0.0
  %528 = vmatmul.mubr.f32.gmra.mxu0 %v388
  %v529 = vpop.f32.mrf.mxu0
  %v530 = vadd.f32 %v436, %v529
  %v531 = vpop.f32.mrf.mxu0
  %532 = vmatprep.mubr.f32.mxu0 0.0
  %533 = vmatmul.mubr.f32.gmra.mxu0 %v389
  %v534 = vpop.f32.mrf.mxu0
  %v535 = vadd.f32 %v436, %v534
  %v536 = vpop.f32.mrf.mxu0
  %537 = vmatprep.mubr.f32.mxu0 0.0
  %538 = vmatmul.mubr.f32.gmra.mxu0 %v390
  %v539 = vpop.f32.mrf.mxu0
  %v540 = vadd.f32 %v436, %v539
  %v541 = vpop.f32.mrf.mxu0
  %542 = vmatprep.mubr.f32.mxu0 0.0
  %543 = vmatmul.mubr.f32.gmra.mxu0 %v391
  %v544 = vpop.f32.mrf.mxu0
  %v545 = vadd.f32 %v436, %v544
  %v546 = vpop.f32.mrf.mxu0
  %547 = vmatprep.mubr.f32.mxu0 0.0
  %548 = vmatmul.mubr.f32.gmra.mxu0 %v392
  %v549 = vpop.f32.mrf.mxu0
  %v550 = vadd.f32 %v436, %v549
  %v551 = vpop.f32.mrf.mxu0
  %552 = vmatprep.mubr.f32.mxu0 0.0
  %553 = vmatmul.mubr.f32.gmra.mxu0 %v393
  %v554 = vpop.f32.mrf.mxu0
  %v555 = vadd.f32 %v436, %v554
  %v556 = vpop.f32.mrf.mxu0
  %557 = vmatprep.mubr.f32.mxu0 0.0
  %558 = vmatmul.mubr.f32.gmra.mxu0 %v394
  %v559 = vpop.f32.mrf.mxu0
  %v560 = vadd.f32 %v436, %v559
  %v561 = vpop.f32.mrf.mxu0
  %562 = vmatprep.mubr.f32.mxu0 0.0
  %563 = vmatmul.mubr.f32.gmra.mxu0 %v395
  %v564 = vpop.f32.mrf.mxu0
  %v565 = vadd.f32 %v436, %v564
  %v566 = vpop.f32.mrf.mxu0
  %567 = vmatprep.mubr.f32.mxu0 0.0
  %568 = vmatmul.mubr.f32.gmra.mxu0 %v396
  %v569 = vpop.f32.mrf.mxu0
  %v570 = vadd.f32 %v436, %v569
  %v571 = vpop.f32.mrf.mxu0
  %572 = vmatprep.mubr.f32.mxu0 0.0
  %573 = vmatmul.mubr.f32.gmra.mxu0 %v397
  %v574 = vpop.f32.mrf.mxu0
  %v575 = vadd.f32 %v436, %v574
  %v576 = vpop.f32.mrf.mxu0
  %577 = vmatprep.mubr.f32.mxu0 0.0
  %578 = vmatmul.mubr.f32.gmra.mxu0 %v398
  %v579 = vpop.f32.mrf.mxu0
  %v580 = vadd.f32 %v436, %v579
  %v581 = vpop.f32.mrf.mxu0
  %582 = vmatprep.mubr.f32.mxu0 0.0
  %583 = vmatmul.mubr.f32.gmra.mxu0 %v399
  %v584 = vpop.f32.mrf.mxu0
  %v585 = vadd.f32 %v436, %v584
  %v586 = vpop.f32.mrf.mxu0
  %587 = vmatprep.mubr.f32.mxu0 0.0
  %588 = vmatmul.mubr.f32.gmra.mxu0 %v400
  %v589 = vpop.f32.mrf.mxu0
  %v590 = vadd.f32 %v436, %v589
  %v591 = vpop.f32.mrf.mxu0
  %592 = vmatprep.mubr.f32.mxu0 0.0
  %593 = vmatmul.mubr.f32.gmra.mxu0 %v401
  %v594 = vpop.f32.mrf.mxu0
  %v595 = vadd.f32 %v436, %v594
  %v596 = vpop.f32.mrf.mxu0
  %597 = vmatprep.mubr.f32.mxu0 0.0
  %598 = vmatmul.mubr.f32.gmra.mxu0 %v402
  %v599 = vpop.f32.mrf.mxu0
  %v600 = vadd.f32 %v436, %v599
  %v601 = vpop.f32.mrf.mxu0
  %602 = vmatprep.mubr.f32.mxu0 0.0
  %603 = vmatmul.mubr.f32.gmra.mxu0 %v403
  %v604 = vpop.f32.mrf.mxu0
  %v605 = vadd.f32 %v436, %v604
  %v606 = vpop.f32.mrf.mxu0
  %607 = vmatprep.mubr.f32.mxu0 0.0
  %608 = vmatmul.mubr.f32.gmra.mxu0 %v404
  %v609 = vpop.f32.mrf.mxu0
  %v610 = vadd.f32 %v436, %v609
  %v611 = vpop.f32.mrf.mxu0
  %612 = vmatprep.mubr.f32.mxu0 0.0
  %613 = vmatmul.mubr.f32.gmra.mxu0 %v405
  %v614 = vpop.f32.mrf.mxu0
  %v615 = vadd.f32 %v436, %v614
  %v616 = vpop.f32.mrf.mxu0
  %617 = vmatprep.mubr.f32.mxu0 0.0
  %618 = vmatmul.mubr.f32.gmra.mxu0 %v406
  %v619 = vpop.f32.mrf.mxu0
  %v620 = vadd.f32 %v436, %v619
  %v621 = vpop.f32.mrf.mxu0
  %622 = vmatprep.mubr.f32.mxu0 0.0
  %623 = vmatmul.mubr.f32.gmra.mxu0 %v407
  %v624 = vpop.f32.mrf.mxu0
  %v625 = vadd.f32 %v436, %v624
  %v626 = vpop.f32.mrf.mxu0
  %627 = vmatprep.mubr.f32.mxu0 0.0
  %628 = vmatmul.mubr.f32.gmra.mxu0 %v408
  %v629 = vpop.f32.mrf.mxu0
  %v630 = vadd.f32 %v436, %v629
  %v631 = vpop.f32.mrf.mxu0
  %632 = vmatprep.mubr.f32.mxu0 0.0
  %633 = vmatmul.mubr.f32.gmra.mxu0 %v409
  %v634 = vpop.f32.mrf.mxu0
  %v635 = vadd.f32 %v436, %v634
  %v636 = vpop.f32.mrf.mxu0
  %637 = vmatprep.mubr.f32.mxu0 0.0
  %638 = vmatmul.mubr.f32.gmra.mxu0 %v410
  %v639 = vpop.f32.mrf.mxu0
  %v640 = vadd.f32 %v436, %v639
  %v641 = vpop.f32.mrf.mxu0
  %642 = vmatprep.mubr.f32.mxu0 0.0
  %643 = vmatmul.mubr.f32.gmra.mxu0 %v411
  %v644 = vpop.f32.mrf.mxu0
  %v645 = vadd.f32 %v436, %v644
  %v646 = vpop.f32.mrf.mxu0
  %647 = vmatprep.mubr.f32.mxu0 0.0
  %648 = vmatmul.mubr.f32.gmra.mxu0 %v412
  %v649 = vpop.f32.mrf.mxu0
  %v650 = vadd.f32 %v436, %v649
  %v651 = vpop.f32.mrf.mxu0
  %652 = vmatprep.mubr.f32.mxu0 0.0
  %653 = vmatmul.mubr.f32.gmra.mxu0 %v413
  %v654 = vpop.f32.mrf.mxu0
  %v655 = vadd.f32 %v436, %v654
  %v656 = vpop.f32.mrf.mxu0
  %657 = vmatprep.mubr.f32.mxu0 0.0
  %658 = vmatmul.mubr.f32.gmra.mxu0 %v414
  %v659 = vpop.f32.mrf.mxu0
  %v660 = vadd.f32 %v436, %v659
  %v661 = vpop.f32.mrf.mxu0
  %662 = vdwg.mxu0
  %vm663 = vcmask 31744
  %664 = vst.msk [vmem:[%s5] sm:$0xff] %vm663, %v505
  %665 = vst.msk [vmem:[%s5 + $0x8] sm:$0xff] %vm663, %v510
  %666 = vst.msk [vmem:[%s5 + $0x10] sm:$0xff] %vm663, %v515
  %667 = vst.msk [vmem:[%s5 + $0x18] sm:$0xff] %vm663, %v520
  %668 = vst.msk [vmem:[%s5 + $0x20] sm:$0xff] %vm663, %v525
  %669 = vst.msk [vmem:[%s5 + $0x28] sm:$0xff] %vm663, %v530
  %670 = vst.msk [vmem:[%s5 + $0x30] sm:$0xff] %vm663, %v535
  %671 = vst.msk [vmem:[%s5 + $0x38] sm:$0xff] %vm663, %v540
  %672 = vst.msk [vmem:[%s5 + $0x40] sm:$0xff] %vm663, %v545
  %673 = vst.msk [vmem:[%s5 + $0x48] sm:$0xff] %vm663, %v550
  %674 = vst.msk [vmem:[%s5 + $0x50] sm:$0xff] %vm663, %v555
  %675 = vst.msk [vmem:[%s5 + $0x58] sm:$0xff] %vm663, %v560
  %676 = vst.msk [vmem:[%s5 + $0x60] sm:$0xff] %vm663, %v565
  %677 = vst.msk [vmem:[%s5 + $0x68] sm:$0xff] %vm663, %v570
  %678 = vst.msk [vmem:[%s5 + $0x70] sm:$0xff] %vm663, %v575
  %679 = vst.msk [vmem:[%s5 + $0x78] sm:$0xff] %vm663, %v580
  %680 = vst.msk [vmem:[%s5 + $0x80] sm:$0xff] %vm663, %v585
  %681 = vst.msk [vmem:[%s5 + $0x88] sm:$0xff] %vm663, %v590
  %682 = vst.msk [vmem:[%s5 + $0x90] sm:$0xff] %vm663, %v595
  %683 = vst.msk [vmem:[%s5 + $0x98] sm:$0xff] %vm663, %v600
  %684 = vst.msk [vmem:[%s5 + $0xa0] sm:$0xff] %vm663, %v605
  %685 = vst.msk [vmem:[%s5 + $0xa8] sm:$0xff] %vm663, %v610
  %686 = vst.msk [vmem:[%s5 + $0xb0] sm:$0xff] %vm663, %v615
  %687 = vst.msk [vmem:[%s5 + $0xb8] sm:$0xff] %vm663, %v620
  %688 = vst.msk [vmem:[%s5 + $0xc0] sm:$0xff] %vm663, %v625
  %689 = vst.msk [vmem:[%s5 + $0xc8] sm:$0xff] %vm663, %v630
  %690 = vst.msk [vmem:[%s5 + $0xd0] sm:$0xff] %vm663, %v635
  %691 = vst.msk [vmem:[%s5 + $0xd8] sm:$0xff] %vm663, %v640
  %692 = vst.msk [vmem:[%s5 + $0xe0] sm:$0xff] %vm663, %v645
  %693 = vst.msk [vmem:[%s5 + $0xe8] sm:$0xff] %vm663, %v650
  %694 = vst.msk [vmem:[%s5 + $0xf0] sm:$0xff] %vm663, %v655
  %695 = vst.msk [vmem:[%s5 + $0xf8] sm:$0xff] %vm663, %v660
  // Predicated region
  $region22: #{tpu_custom_call.1} parent=0 // pred_check
    _
  $region23: #{tpu_custom_call.1} parent=0 // pred_check_branch
    %697 = sbr.rel (0) target = $region25
  $region24: #{tpu_custom_call.1} parent=0 // pred_region
    _
  $region25: #{tpu_custom_call.1} parent=0 // pred_fallthru
    _
  // Predicated region
  $region26: #{tpu_custom_call.1} parent=0 // pred_check
    _
  $region27: #{tpu_custom_call.1} parent=0 // pred_check_branch
    %699 = sbr.rel (0) target = $region29
  $region28: #{tpu_custom_call.1} parent=0 // pred_region
    _
  $region29: #{tpu_custom_call.1} parent=0 // pred_fallthru
    _

</llo_original>
